<compile_context>
chip_gen: v5e
topology: v5e:2x2
jax: 0.10.0
libtpu: 0.0.40
codegen_flags: <defaults>
</compile_context>

<pallas_src>
import jax
import jax.numpy as jnp
import numpy as np
from jax.experimental import pallas as pl
from jax.experimental.pallas import tpu as pltpu

KH = KW = 3  # fixed 3x3 Laplacian


def laplace_conv_kernel(x_ref, o_ref):
    """One grid step = TB images.

    x_ref: (TB, 1, H,   Wp) VMEM, Wp multiple of 128 (zero-padded columns)
    o_ref: (TB, 1, H-2, Wp) VMEM; column j holds the stencil centred at input
           column j ("same" indexing); the wrapper keeps columns [1 : W-1).
    """
    hv = o_ref.shape[2]          # H - 2
    wp = o_ref.shape[3]          # padded width (multiple of 128)

    x = x_ref[...]               # (TB, 1, H, Wp)
    up = x[:, :, 0:hv, :]        # row i
    mid = x[:, :, 1:1 + hv, :]   # row i + 1
    dn = x[:, :, 2:2 + hv, :]    # row i + 2

    # Horizontal neighbours via lane rotation (XLU). Rotation direction does
    # not matter: the left/right taps have equal weight, and wrapped columns
    # only reach output columns 0 and Wp-1, which are discarded by the wrapper.
    lr = pltpu.roll(mid, shift=1, axis=3) + pltpu.roll(mid, shift=wp - 1, axis=3)

    o_ref[...] = up + dn + lr - 4.0 * mid


def _choose_batch_tile(n, h, hv, wp, budget_bytes=16 * 1024 * 1024):
    """Images per grid step, sized for VMEM (in+out blocks, double-buffered)."""
    per_image = (h * wp + hv * wp) * 4 * 2
    tb = int(max(1, min(n, budget_bytes // max(per_image, 1))))
    # Keep >= 2 grid steps (v7x megacore) once per-step work is non-trivial.
    if tb == n and n > 1 and per_image * n > (2 << 20):
        tb = max(1, n // 2)
    while n % tb:                # make the grid exact
        tb -= 1
    return tb


def laplace_conv2d(x: jax.Array) -> jax.Array:
    """x: (N, 1, H, W) float32 -> (N, 1, H-2, W-2) float32 (valid 3x3 conv)."""
    n, c, h, w = x.shape
    assert c == 1, "LaplaceConv2d has in_channels=1"
    hv, wo = h - (KH - 1), w - (KW - 1)
    assert hv >= 1 and wo >= 1

    # Lane-dense padded width (multiple of 128). Padding never reaches the
    # kept output columns, so it is purely a layout change.
    wp = max(128, ((w + 127) // 128) * 128)
    xp = jnp.pad(x, ((0, 0), (0, 0), (0, 0), (0, wp - w))) if wp != w else x
    xp = xp.astype(jnp.float32)

    tb = _choose_batch_tile(n, h, hv, wp)
    # TODO(synk): for very large images (one image's in+out blocks exceeding
    # the VMEM budget) add H-tiling with a 2-row halo instead of full-H blocks.

    out = pl.pallas_call(
        laplace_conv_kernel,
        out_shape=jax.ShapeDtypeStruct((n, 1, hv, wp), jnp.float32),
        grid_spec=pltpu.PrefetchScalarGridSpec(
            num_scalar_prefetch=0,
            grid=(n // tb,),
            in_specs=[pl.BlockSpec((tb, 1, h, wp), lambda i: (i, 0, 0, 0))],
            out_specs=pl.BlockSpec((tb, 1, hv, wp), lambda i: (i, 0, 0, 0)),
        ),
        compiler_params=pltpu.CompilerParams(
            dimension_semantics=("parallel",),
            vmem_limit_bytes=32 * 1024 * 1024,
        ),
    )(xp)

    # Valid conv output = "same"-indexed columns 1 .. W-2 of the padded result.
    return out[:, :, :, 1:1 + wo]


def _reference_laplace(x: np.ndarray) -> np.ndarray:
    """Pure-numpy reference of the valid 3x3 Laplacian conv (NCHW)."""
    n, _, h, w = x.shape
    ho, wo = h - 2, w - 2
    k = np.array([[0.0, 1.0, 0.0], [1.0, -4.0, 1.0], [0.0, 1.0, 0.0]],
                 dtype=np.float32)
    out = np.zeros((n, 1, ho, wo), dtype=np.float32)
    for ki in range(3):
        for kj in range(3):
            out[:, 0] += k[ki, kj] * x[:, 0, ki:ki + ho, kj:kj + wo]
    return out


if __name__ == "__main__":
    key = jax.random.PRNGKey(0)
    x = jax.random.normal(key, (2, 1, 16, 16), dtype=jnp.float32)

    out = jax.block_until_ready(laplace_conv2d(x))

    ref = _reference_laplace(np.asarray(x))
    np.testing.assert_allclose(np.asarray(out), ref, rtol=1e-5, atol=1e-5)

    print("KERNEL_OK")
</pallas_src>

<mosaic_0001>
module attributes {stable_mosaic.version = 11 : i64} {
  func.func @laplace_conv_kernel(%arg0: i32, %arg1: memref<2x1x16x128xf32, #tpu.memory_space<vmem>>, %arg2: memref<2x1x14x128xf32, #tpu.memory_space<vmem>>) attributes {dimension_semantics = [#tpu.dimension_semantics<parallel>], iteration_bounds = array<i64: 1>, scalar_prefetch = 0 : i64, scratch_operands = 0 : i64, tpu.core_type = #tpu.core_type<tc>, window_params = [{transform_indices = @transform_0, window_bounds = array<i64: 2, 1, 16, 128>}, {transform_indices = @transform_1, window_bounds = array<i64: 2, 1, 14, 128>}]} {
    %c0 = arith.constant 0 : index
    %c0_0 = arith.constant 0 : index
    %c0_1 = arith.constant 0 : index
    %c0_2 = arith.constant 0 : index
    %0 = vector.load %arg1[%c0, %c0_0, %c0_1, %c0_2] : memref<2x1x16x128xf32, #tpu.memory_space<vmem>>, vector<2x1x16x128xf32>
    %1 = vector.extract_strided_slice %0 {offsets = [0, 0, 0, 0], sizes = [2, 1, 14, 128], strides = [1, 1, 1, 1]} : vector<2x1x16x128xf32> to vector<2x1x14x128xf32>
    %2 = vector.extract_strided_slice %0 {offsets = [0, 0, 1, 0], sizes = [2, 1, 14, 128], strides = [1, 1, 1, 1]} : vector<2x1x16x128xf32> to vector<2x1x14x128xf32>
    %3 = vector.extract_strided_slice %0 {offsets = [0, 0, 2, 0], sizes = [2, 1, 14, 128], strides = [1, 1, 1, 1]} : vector<2x1x16x128xf32> to vector<2x1x14x128xf32>
    %c1_i32 = arith.constant 1 : i32
    %4 = tpu.dynamic_rotate %2 by %c1_i32 dim 3 : vector<2x1x14x128xf32>, i32 -> vector<2x1x14x128xf32>
    %c127_i32 = arith.constant 127 : i32
    %5 = tpu.dynamic_rotate %2 by %c127_i32 dim 3 : vector<2x1x14x128xf32>, i32 -> vector<2x1x14x128xf32>
    %6 = arith.addf %4, %5 : vector<2x1x14x128xf32>
    %7 = arith.addf %1, %3 : vector<2x1x14x128xf32>
    %8 = arith.addf %7, %6 : vector<2x1x14x128xf32>
    %cst = arith.constant 4.000000e+00 : f32
    %9 = vector.broadcast %cst : f32 to vector<2x1x14x128xf32>
    %10 = arith.mulf %9, %2 : vector<2x1x14x128xf32>
    %11 = arith.subf %8, %10 : vector<2x1x14x128xf32>
    %c0_3 = arith.constant 0 : index
    %c0_4 = arith.constant 0 : index
    %c0_5 = arith.constant 0 : index
    %c0_6 = arith.constant 0 : index
    %12 = vector.load %arg2[%c0_3, %c0_4, %c0_5, %c0_6] : memref<2x1x14x128xf32, #tpu.memory_space<vmem>>, vector<2x1x14x128xf32>
    tpu.vector_store %arg2[%c0_3, %c0_4, %c0_5, %c0_6], %11 {strides = array<i32>} : memref<2x1x14x128xf32, #tpu.memory_space<vmem>>, vector<2x1x14x128xf32>,
    return
  }
  func.func @transform_0(%arg0: i32) -> (i32, i32, i32, i32) {
    %c0_i32 = arith.constant 0 : i32
    %c0_i32_0 = arith.constant 0 : i32
    %c0_i32_1 = arith.constant 0 : i32
    %c0_i32_2 = arith.constant 0 : i32
    return %arg0, %c0_i32, %c0_i32_0, %c0_i32_1 : i32, i32, i32, i32
  }
  func.func @transform_1(%arg0: i32) -> (i32, i32, i32, i32) {
    %c0_i32 = arith.constant 0 : i32
    %c0_i32_0 = arith.constant 0 : i32
    %c0_i32_1 = arith.constant 0 : i32
    %c0_i32_2 = arith.constant 0 : i32
    return %arg0, %c0_i32, %c0_i32_0, %c0_i32_1 : i32, i32, i32, i32
  }
}

</mosaic_0001>

<llo_original>
// kernel: tpu_custom_call.1
$region0: #{tpu_custom_call.1}
  #allocation0 [shape = 'u32[]', space=smem, size = 0x4, offset = 0x4, fixed_abs, tag = 'smem constant byte address 0x4 - core index']
  #allocation1 [shape = 'u32[72,128]{1,0:T(1,128)}', space=vmem, size = 0x9000, scoped, tag = 'internal scratch']
  %s0 = inlined_call_operand.hbm [shape: f32[2,1,16,128], index: 0, kind: input, shape index: {}]
  %s1 = inlined_call_operand.vmem [shape: f32[2,1,14,128], index: 1, kind: output, shape index: {}]
  %s2 = sld [smem:[#allocation0]]
  $region18: #{tpu_custom_call.1} parent=0
    _
  %s4 = ssub.s32 1, %s2
  %s5 = scalar_select 0, %s4, %s2
  $region1: #{tpu_custom_call.1} parent=0
    #allocation2 [shape = 'u8[16384]{0}', space=vmem, size = 0x4000, scoped, tag = 'input window, operand 0, single buffered']
    #allocation3 [shape = 's32[1]{0}', space=sflag, size = 0x4, scoped, tag = 'scoped memory for tpu_custom_call.1']
    %6 = vsyncpa [#allocation3], 0
    // Predicated region
    $region2: #{tpu_custom_call.1} parent=1 // pred_check
      _
    $region3: #{tpu_custom_call.1} parent=1 // pred_check_branch
      %8 = sbr.rel (0) target = $region5
    $region4: #{tpu_custom_call.1} parent=1 // pred_region
      %10 = vsyncadd [#allocation3], 0
      %s11 = sshll.u32 %s0, 4
      %s12 = int_to_ptr.hbm [resolvable:$true] %s11
      %s13 = sshll.u32 [#allocation2], 4
      %s14 = int_to_ptr.vmem [resolvable:$true] %s13
      %19 = dma.hbm_to_vmem [thread:$0]  %s12, 512, %s14, [#allocation3], 128, 128, 8
    $region5: #{tpu_custom_call.1} parent=1 // pred_fallthru
      _
    // Predicated region
    $region6: #{tpu_custom_call.1} parent=1 // pred_check
      _
    $region7: #{tpu_custom_call.1} parent=1 // pred_check_branch
      %21 = sbr.rel (0) target = $region9
    $region8: #{tpu_custom_call.1} parent=1 // pred_region
      %23 = dma.done [#allocation3], 512
    $region9: #{tpu_custom_call.1} parent=1 // pred_fallthru
      _
    %v24 = vld [vmem:[#allocation2] sm:$0xff]
    %v25 = vld [vmem:[#allocation2 + $0x8] sm:$0xff]
    %v26 = vld [vmem:[#allocation2 + $0x10] sm:$0xff]
    %v27 = vld [vmem:[#allocation2 + $0x18] sm:$0xff]
    %vm32 = vcmask 1046528
    %v33 = vrot.slane %v24, 1
    %v34 = vrot.slane %v25, 1
    %v35 = vsel %vm32, %v33, %v34
    %v36 = vrot.slane %v26, 1
    %v37 = vrot.slane %v27, 1
    %v38 = vsel %vm32, %v36, %v37
    %43 = vrot.lane.b32.xlu0 %v35, 1
    %v44 = vpop.permute.xlu0 %43
    %45 = vrot.lane.b32.xlu0 %v34, 1
    %v46 = vpop.permute.xlu0 %45
    %47 = vrot.lane.b32.xlu0 %v38, 1
    %v48 = vpop.permute.xlu0 %47
    %49 = vrot.lane.b32.xlu0 %v37, 1
    %v50 = vpop.permute.xlu0 %49
    %51 = vrot.lane.b32.xlu0 %v35, 127
    %v52 = vpop.permute.xlu0 %51
    %53 = vrot.lane.b32.xlu0 %v34, 127
    %v54 = vpop.permute.xlu0 %53
    %55 = vrot.lane.b32.xlu0 %v38, 127
    %v56 = vpop.permute.xlu0 %55
    %57 = vrot.lane.b32.xlu0 %v37, 127
    %v58 = vpop.permute.xlu0 %57
    %v59 = vadd.f32 %v44, %v52
    %v60 = vadd.f32 %v46, %v54
    %v61 = vadd.f32 %v48, %v56
    %v62 = vadd.f32 %v50, %v58
    %vm63 = vcmask 1045504
    %v64 = vrot.slane %v24, 2
    %v65 = vrot.slane %v25, 2
    %v66 = vsel %vm63, %v64, %v65
    %v67 = vrot.slane %v26, 2
    %v68 = vrot.slane %v27, 2
    %v69 = vsel %vm63, %v67, %v68
    %v74 = vadd.f32 %v24, %v66
    %v75 = vadd.f32 %v25, %v65
    %v76 = vadd.f32 %v26, %v69
    %v77 = vadd.f32 %v27, %v68
    %v78 = vadd.f32 %v74, %v59
    %v79 = vadd.f32 %v75, %v60
    %v80 = vadd.f32 %v76, %v61
    %v81 = vadd.f32 %v77, %v62
    %v82 = vmul.f32 %v24, 4.0
    %v83 = vmul.f32 %v25, 4.0
    %v84 = vmul.f32 %v26, 4.0
    %v85 = vmul.f32 %v27, 4.0
    %v90 = vrot.slane %v82, 1
    %v91 = vrot.slane %v83, 1
    %v92 = vsel %vm32, %v90, %v91
    %v93 = vrot.slane %v84, 1
    %v94 = vrot.slane %v85, 1
    %v95 = vsel %vm32, %v93, %v94
    %v100 = vsub.f32 %v78, %v92
    %v101 = vsub.f32 %v79, %v91
    %v102 = vsub.f32 %v80, %v95
    %v103 = vsub.f32 %v81, %v94
    %104 = vst [vmem:[%s1] sm:$0xff] %v100
    %105 = vst [vmem:[%s1 + $0x8] sm:$0x3f] %v101
    %106 = vst [vmem:[%s1 + $0x10] sm:$0xff] %v102
    %107 = vst [vmem:[%s1 + $0x18] sm:$0x3f] %v103
    // Predicated region
    $region10: #{tpu_custom_call.1} parent=1 // pred_check
      _
    $region11: #{tpu_custom_call.1} parent=1 // pred_check_branch
      %109 = sbr.rel (0) target = $region13
    $region12: #{tpu_custom_call.1} parent=1 // pred_region
      _
    $region13: #{tpu_custom_call.1} parent=1 // pred_fallthru
      _
    // Predicated region
    $region14: #{tpu_custom_call.1} parent=1 // pred_check
      _
    $region15: #{tpu_custom_call.1} parent=1 // pred_check_branch
      %111 = sbr.rel (0) target = $region17
    $region16: #{tpu_custom_call.1} parent=1 // pred_region
      _
    $region17: #{tpu_custom_call.1} parent=1 // pred_fallthru
      _
    %112 = vsyncpa [#allocation3], 1

</llo_original>
